<compile_context>
chip_gen: v7x
topology: tpu7x:2x2x1
jax: 0.10.0
libtpu: 0.0.40
codegen_flags: <defaults>
</compile_context>

<pallas_src>
import functools

import numpy as np
import jax
import jax.numpy as jnp
from jax import lax
from jax.experimental import pallas as pl
from jax.experimental.pallas import tpu as pltpu

# ----------------------------- configuration -------------------------------
D_HISTORY = 32
D_INTENSITY = 32
NUM_EVENTS = 4
MLP_LAYERS = 2
ALPHA = 0.5          # output_factor  (pretrain=False -> plain constant)
BETA = 0.5           # residual_factor
DENOM_SHIFT = 1e-8
ROW_TILE = 1024      # (b*s) rows per grid step (shrunk automatically if small)


def _round_up(x, m):
    return ((x + m - 1) // m) * m


# ------------------------------ Pallas kernel -------------------------------
def _iem_kernel(hid_ref, tn_ref,
                wh_ref, bh_ref, mw_ref, bt_ref, tz_ref,
                wm_ref, bm_ref, wa_ref, ba_ref,
                out_ref,
                *, n_layers, n_events, alpha, beta, denom_shift):
    """One row-tile of the IFIB IEM stack (event-packed lane layout).

    hid_ref : (TR, d_history)      bf16 LSTM hidden states, one row per (b,s)
    tn_ref  : (TR, num_events)     bf16 normalized time_next per event
    wh_ref  : (d_history, ne*di)   history_mapper W^T tiled along events
    bh_ref  : (1, ne*di)           history_mapper bias tiled
    mw_ref  : (ne, ne*di)          per-event softplus(weight_for_t) row already
                                   pushed through the block-diag time_mapper
    bt_ref  : (1, ne*di)           time_mapper bias tiled
    tz_ref  : (1, ne*di)           constant time-zero embedding after time_mapper
    wm_ref  : (L, ne*di, ne*di)    block-diagonal NonNeg MLP weights
    bm_ref  : (L, 1, ne*di)        tiled MLP biases
    wa_ref  : (ne*di, ne)          block-diagonal aggregate weight
    ba_ref  : (1, ne)              aggregate bias
    out_ref : (TR, ne)             final p_int(t..inf, e) / (sum_e p_int(tl..inf, e) + eps)
    """
    f32 = jnp.float32
    hid = hid_ref[...].astype(f32)                     # (TR, dh)
    tn = tn_ref[...].astype(f32)                       # (TR, ne)
    tr = hid.shape[0]

    # history_mapper, replicated across events along the lane axis (one MXU dot).
    hm = jnp.dot(hid, wh_ref[...], preferred_element_type=f32) + bh_ref[...]

    # time_mapper(t_next * softplus(w_t)) == tn @ (M @ W_bd): tiny K=ne contraction,
    # done on the VPU with row-scalar broadcasts (keeps the MXU for the big dots).
    te = tn[:, 0:1] * mw_ref[0:1, :]
    for e in range(1, n_events):
        te = te + tn[:, e:e + 1] * mw_ref[e:e + 1, :]

    out_t = hm + te + bt_ref[...]                      # time_next path
    out_z = hm + tz_ref[...]                           # time-zero path (const time part)

    # Stack the twin paths along M: one MXU pass per MLP layer / aggregate.
    x = jnp.concatenate([out_t, out_z], axis=0)        # (2*TR, ne*di)
    for l in range(n_layers):                          # static unroll
        y = jnp.dot(x, wm_ref[l], preferred_element_type=f32) + bm_ref[l]
        x = beta * x + alpha * jnp.tanh(y)

    agg = jnp.dot(x, wa_ref[...], preferred_element_type=f32) + ba_ref[...]   # (2*TR, ne)
    p = jax.nn.sigmoid(-agg)
    pit = p[:tr]                                       # (TR, ne)
    piz = p[tr:]                                       # (TR, ne)
    denom = jnp.sum(piz, axis=-1, keepdims=True) + denom_shift
    out_ref[...] = (pit / denom).astype(out_ref.dtype)


def _run_iem_pallas(hid, tn, wh, bh, mw, bt, tz, wm, bm, wa, ba):
    n_rows, dh = hid.shape
    ne = tn.shape[1]
    n_layers = wm.shape[0]

    # Shrink the tile for tiny inputs so no padding copy is needed then.
    tr = min(ROW_TILE, _round_up(n_rows, 8))
    n_pad = _round_up(n_rows, tr)
    pad = n_pad - n_rows
    if pad:
        hid = jnp.pad(hid, ((0, pad), (0, 0)))
        tn = jnp.pad(tn, ((0, pad), (0, 0)))

    kernel = functools.partial(
        _iem_kernel, n_layers=n_layers, n_events=ne,
        alpha=float(max(ALPHA, 0.0)), beta=float(max(BETA, 0.0)),
        denom_shift=DENOM_SHIFT)

    row = lambda d: pl.BlockSpec((tr, d), lambda i: (i, 0))
    full = lambda shp: pl.BlockSpec(shp, lambda i, _n=len(shp): (0,) * _n)

    out = pl.pallas_call(
        kernel,
        out_shape=jax.ShapeDtypeStruct((n_pad, ne), jnp.float32),
        grid=(n_pad // tr,),
        in_specs=[
            row(dh),            # hidden rows (bf16 on the wire)
            row(ne),            # time_next rows (bf16 on the wire)
            full(wh.shape),     # history_mapper W^T tiled   (dh, ne*di)
            full(bh.shape),     # history_mapper bias tiled  (1, ne*di)
            full(mw.shape),     # time path projection       (ne, ne*di)
            full(bt.shape),     # time_mapper bias tiled     (1, ne*di)
            full(tz.shape),     # time-zero constant row     (1, ne*di)
            full(wm.shape),     # block-diag MLP weights     (L, ne*di, ne*di)
            full(bm.shape),     # MLP biases tiled           (L, 1, ne*di)
            full(wa.shape),     # block-diag aggregate       (ne*di, ne)
            full(ba.shape),     # aggregate bias             (1, ne)
        ],
        out_specs=pl.BlockSpec((tr, ne), lambda i: (i, 0)),
        compiler_params=pltpu.CompilerParams(
            dimension_semantics=("parallel",)),
    )(hid, tn, wh, bh, mw, bt, tz, wm, bm, wa, ba)

    return out[:n_rows]


# ------------------------------- plain-JAX glue ------------------------------
def _lstm_forward(x, w_ih, w_hh, b_ih, b_hh):
    # TODO(synk): LSTM recurrence (nn.LSTM) is sequential; kept in plain JAX lax.scan.
    b, s, _ = x.shape
    dh = w_hh.shape[1]

    def step(carry, xt):
        h, c = carry
        gates = xt @ w_ih.T + h @ w_hh.T + b_ih + b_hh
        i, f, g, o = jnp.split(gates, 4, axis=-1)
        i = jax.nn.sigmoid(i)
        f = jax.nn.sigmoid(f)
        g = jnp.tanh(g)
        o = jax.nn.sigmoid(o)
        c = f * c + i * g
        h = o * jnp.tanh(c)
        return (h, c), h

    h0 = jnp.zeros((b, dh), jnp.float32)
    c0 = jnp.zeros((b, dh), jnp.float32)
    (_, _), hs = lax.scan(step, (h0, c0), jnp.swapaxes(x, 0, 1))
    return jnp.swapaxes(hs, 0, 1)


def _encode_history(params, events_history, time_history, mean, var):
    th = (time_history - mean) / var
    emb = params["event_emb"][events_history]                     # [b,s,dh]
    history = jnp.concatenate([emb, th[..., None]], axis=-1)      # [b,s,dh+1]
    return _lstm_forward(history, params["w_ih"], params["w_hh"],
                         params["b_ih"], params["b_hh"])          # [b,s,dh]


def _build_iem_weights(params, mean, var):
    """Fold the per-event IEM stack into event-packed (lane = ne*di) weights."""
    ne, di = NUM_EVENTS, D_INTENSITY
    eye = jnp.eye(ne, dtype=jnp.float32)

    wh_wide = jnp.tile(params["hist_W"].T, (1, ne))                 # (dh, ne*di)
    bh_wide = jnp.tile(params["hist_b"], ne)[None, :]               # (1, ne*di)

    wt_soft = jax.nn.softplus(params["weight_for_t"])               # (ne, di)
    wt_bd = jnp.kron(eye, jax.nn.softplus(params["time_W"]).T)      # (ne*di, ne*di)
    # M maps (tn per event) -> flattened per-event time embedding; fuse with time_mapper.
    m_exp = (eye[:, :, None] * wt_soft[None, :, :]).reshape(ne, ne * di)
    mw = m_exp @ wt_bd                                              # (ne, ne*di)
    bt_wide = jnp.tile(params["time_b"], ne)[None, :]               # (1, ne*di)

    # time-zero embedding is a per-call constant: precompute it fully mapped.
    tz_val = -mean / var
    tz_row = (tz_val * wt_soft.reshape(1, ne * di)) @ wt_bd + bt_wide   # (1, ne*di)

    wm = jnp.stack([jnp.kron(eye, jax.nn.softplus(w).T) for w in params["mlp_W"]])
    bm = jnp.stack([jnp.tile(bv, ne)[None, :] for bv in params["mlp_b"]])

    wa_bd = jnp.kron(eye, jax.nn.softplus(params["agg_W"]).T)       # (ne*di, ne)
    ba_wide = jnp.broadcast_to(params["agg_b"].reshape(1, 1), (1, ne))
    return wh_wide, bh_wide, mw, bt_wide, tz_row, wm, bm, wa_bd, ba_wide


def ifib_forward(params, events_history, time_history, time_next, mean, var):
    hidden = _encode_history(params, events_history, time_history, mean, var)
    b, s, dh = hidden.shape
    ne = NUM_EVENTS

    tn = (time_next - mean) / var                                   # [b,s,ne]
    n_rows = b * s
    # bf16 on the wire for the two per-row streams; f32 math inside the kernel.
    hid_rows = hidden.reshape(n_rows, dh).astype(jnp.bfloat16)
    tn_rows = tn.reshape(n_rows, ne).astype(jnp.bfloat16)

    wh, bh, mw, bt, tz, wm, bm, wa, ba = _build_iem_weights(params, mean, var)
    out = _run_iem_pallas(hid_rows, tn_rows, wh, bh, mw, bt, tz, wm, bm, wa, ba)
    return out.reshape(b, s, ne)                                    # [b, s, num_events]


def ifib_forward_ref(params, events_history, time_history, time_next, mean, var):
    """Pure-JAX f32 reference (same math as the PyTorch forward)."""
    hidden = _encode_history(params, events_history, time_history, mean, var)
    ne, di = NUM_EVENTS, D_INTENSITY

    hm = hidden @ params["hist_W"].T + params["hist_b"]             # [b,s,di]
    hm = hm[:, :, None, :]                                          # broadcast over events

    tn = (time_next - mean) / var                                   # [b,s,ne]
    tz = jnp.full_like(tn, -mean / var)
    wt_soft = jax.nn.softplus(params["weight_for_t"])               # (ne, di)
    temb = tn[..., None] * wt_soft
    tzemb = tz[..., None] * wt_soft
    wt_T = jax.nn.softplus(params["time_W"]).T
    out = temb @ wt_T + params["time_b"] + hm
    out0 = tzemb @ wt_T + params["time_b"] + hm

    alpha, beta = max(ALPHA, 0.0), max(BETA, 0.0)
    for l in range(MLP_LAYERS):
        w = jax.nn.softplus(params["mlp_W"][l]).T
        bvec = params["mlp_b"][l]
        out = beta * out + alpha * jnp.tanh(out @ w + bvec)
        out0 = beta * out0 + alpha * jnp.tanh(out0 @ w + bvec)

    wa = jax.nn.softplus(params["agg_W"]).T                         # (di,1)
    ba = params["agg_b"]
    pit = jax.nn.sigmoid(-(out @ wa + ba))[..., 0]                  # [b,s,ne]
    piz = jax.nn.sigmoid(-(out0 @ wa + ba))[..., 0]
    return pit / (jnp.sum(piz, axis=-1, keepdims=True) + DENOM_SHIFT)


# ------------------------------ parameter init -------------------------------
def init_params(key):
    dh, di, ne, nl = D_HISTORY, D_INTENSITY, NUM_EVENTS, MLP_LAYERS
    ks = list(jax.random.split(key, 12 + 2 * nl))

    def uni(k, shape, bound):
        return jax.random.uniform(k, shape, jnp.float32, -bound, bound)

    # xavier_uniform for weight_for_t (num_events, d_intensity)
    bound_x = float(np.sqrt(6.0 / (ne + di)))
    weight_for_t = uni(ks[0], (ne, di), bound_x)

    # embedding (num_events + 1, dh), padding row = 0
    emb = jax.random.normal(ks[1], (ne + 1, dh), jnp.float32)
    emb = emb.at[ne].set(0.0)

    k_lstm = 1.0 / np.sqrt(dh)
    params = {
        "weight_for_t": weight_for_t,
        "event_emb": emb,
        "w_ih": uni(ks[2], (4 * dh, dh + 1), k_lstm),
        "w_hh": uni(ks[3], (4 * dh, dh), k_lstm),
        "b_ih": uni(ks[4], (4 * dh,), k_lstm),
        "b_hh": uni(ks[5], (4 * dh,), k_lstm),
        "hist_W": uni(ks[6], (di, dh), 1.0 / np.sqrt(dh)),
        "hist_b": uni(ks[7], (di,), 1.0 / np.sqrt(dh)),
        "time_W": uni(ks[8], (di, di), 1.0 / np.sqrt(di)),
        "time_b": uni(ks[9], (di,), 1.0 / np.sqrt(di)),
        "agg_W": uni(ks[10], (1, di), 1.0 / np.sqrt(di)),
        "agg_b": uni(ks[11], (1,), 1.0 / np.sqrt(di)),
        "mlp_W": [uni(ks[12 + 2 * l], (di, di), 1.0 / np.sqrt(di)) for l in range(nl)],
        "mlp_b": [uni(ks[13 + 2 * l], (di,), 1.0 / np.sqrt(di)) for l in range(nl)],
    }
    return params


# ----------------------------------- main ------------------------------------
if __name__ == "__main__":
    params = init_params(jax.random.PRNGKey(0))

    batch, seq = 2, 8
    k1, k2, k3 = jax.random.split(jax.random.PRNGKey(1), 3)
    events_history = jax.random.randint(k1, (batch, seq), 0, NUM_EVENTS)
    time_history = jax.random.uniform(k2, (batch, seq), jnp.float32, 0.0, 2.0)
    time_next = jax.random.uniform(k3, (batch, seq, NUM_EVENTS), jnp.float32, 0.0, 2.0)
    mean, var = 1.0, 0.5

    fwd = jax.jit(ifib_forward)
    out = fwd(params, events_history, time_history, time_next, mean, var)
    out = jax.block_until_ready(out)

    ref = ifib_forward_ref(params, events_history, time_history, time_next, mean, var)
    # bf16-on-the-wire row streams vs. the pure-f32 reference -> loose tolerance.
    np.testing.assert_allclose(np.asarray(out), np.asarray(ref), atol=3e-2, rtol=3e-2)
    assert out.shape == (batch, seq, NUM_EVENTS)
    assert bool(jnp.all(jnp.isfinite(out)))

    print("KERNEL_OK")
</pallas_src>

<mosaic_0001>
module attributes {stable_mosaic.version = 11 : i64} {
  func.func @_iem_kernel(%arg0: i32, %arg1: memref<16x32xbf16, #tpu.memory_space<vmem>>, %arg2: memref<16x4xbf16, #tpu.memory_space<vmem>>, %arg3: memref<32x128xf32, #tpu.memory_space<vmem>>, %arg4: memref<1x128xf32, #tpu.memory_space<vmem>>, %arg5: memref<4x128xf32, #tpu.memory_space<vmem>>, %arg6: memref<1x128xf32, #tpu.memory_space<vmem>>, %arg7: memref<1x128xf32, #tpu.memory_space<vmem>>, %arg8: memref<2x128x128xf32, #tpu.memory_space<vmem>>, %arg9: memref<2x1x128xf32, #tpu.memory_space<vmem>>, %arg10: memref<128x4xf32, #tpu.memory_space<vmem>>, %arg11: memref<1x4xf32, #tpu.memory_space<vmem>>, %arg12: memref<16x4xf32, #tpu.memory_space<vmem>>) attributes {dimension_semantics = [#tpu.dimension_semantics<parallel>], iteration_bounds = array<i64: 1>, scalar_prefetch = 0 : i64, scratch_operands = 0 : i64, tpu.core_type = #tpu.core_type<tc>, window_params = [{transform_indices = @transform_0, window_bounds = array<i64: 16, 32>}, {transform_indices = @transform_1, window_bounds = array<i64: 16, 4>}, {pipeline_mode = #tpu.pipeline_mode<synchronous>, transform_indices = @transform_2, window_bounds = array<i64: 32, 128>}, {pipeline_mode = #tpu.pipeline_mode<synchronous>, transform_indices = @transform_3, window_bounds = array<i64: 1, 128>}, {pipeline_mode = #tpu.pipeline_mode<synchronous>, transform_indices = @transform_4, window_bounds = array<i64: 4, 128>}, {pipeline_mode = #tpu.pipeline_mode<synchronous>, transform_indices = @transform_5, window_bounds = array<i64: 1, 128>}, {pipeline_mode = #tpu.pipeline_mode<synchronous>, transform_indices = @transform_6, window_bounds = array<i64: 1, 128>}, {pipeline_mode = #tpu.pipeline_mode<synchronous>, transform_indices = @transform_7, window_bounds = array<i64: 2, 128, 128>}, {pipeline_mode = #tpu.pipeline_mode<synchronous>, transform_indices = @transform_8, window_bounds = array<i64: 2, 1, 128>}, {pipeline_mode = #tpu.pipeline_mode<synchronous>, transform_indices = @transform_9, window_bounds = array<i64: 128, 4>}, {pipeline_mode = #tpu.pipeline_mode<synchronous>, transform_indices = @transform_10, window_bounds = array<i64: 1, 4>}, {transform_indices = @transform_11, window_bounds = array<i64: 16, 4>}]} {
    %c0 = arith.constant 0 : index
    %c0_0 = arith.constant 0 : index
    %0 = vector.load %arg1[%c0, %c0_0] : memref<16x32xbf16, #tpu.memory_space<vmem>>, vector<16x32xbf16>
    %1 = arith.extf %0 : vector<16x32xbf16> to vector<16x32xf32>
    %c0_1 = arith.constant 0 : index
    %c0_2 = arith.constant 0 : index
    %2 = vector.load %arg2[%c0_1, %c0_2] : memref<16x4xbf16, #tpu.memory_space<vmem>>, vector<16x4xbf16>
    %3 = arith.extf %2 : vector<16x4xbf16> to vector<16x4xf32>
    %c0_3 = arith.constant 0 : index
    %c0_4 = arith.constant 0 : index
    %4 = vector.load %arg3[%c0_3, %c0_4] : memref<32x128xf32, #tpu.memory_space<vmem>>, vector<32x128xf32>
    %cst = arith.constant dense<0.000000e+00> : vector<16x128xf32>
    %5 = tpu.matmul %1, %4, %cst {dimension_numbers = #tpu.dot_dimension_numbers<[1], [0], [0], [1], [0, 0, 1, 1], [], []>} : vector<16x32xf32>, vector<32x128xf32>, vector<16x128xf32> -> vector<16x128xf32>
    %c0_5 = arith.constant 0 : index
    %c0_6 = arith.constant 0 : index
    %6 = vector.load %arg4[%c0_5, %c0_6] : memref<1x128xf32, #tpu.memory_space<vmem>>, vector<1x128xf32>
    %7 = vector.broadcast %6 : vector<1x128xf32> to vector<16x128xf32>
    %8 = arith.addf %5, %7 : vector<16x128xf32>
    %9 = vector.extract_strided_slice %3 {offsets = [0, 0], sizes = [16, 1], strides = [1, 1]} : vector<16x4xf32> to vector<16x1xf32>
    %c0_7 = arith.constant 0 : index
    %c0_8 = arith.constant 0 : index
    %10 = vector.load %arg5[%c0_7, %c0_8] : memref<4x128xf32, #tpu.memory_space<vmem>>, vector<1x128xf32>
    %11 = vector.broadcast %9 : vector<16x1xf32> to vector<16x128xf32>
    %12 = vector.broadcast %10 : vector<1x128xf32> to vector<16x128xf32>
    %13 = arith.mulf %11, %12 : vector<16x128xf32>
    %14 = vector.extract_strided_slice %3 {offsets = [0, 1], sizes = [16, 1], strides = [1, 1]} : vector<16x4xf32> to vector<16x1xf32>
    %c1 = arith.constant 1 : index
    %c0_9 = arith.constant 0 : index
    %15 = vector.load %arg5[%c1, %c0_9] : memref<4x128xf32, #tpu.memory_space<vmem>>, vector<1x128xf32>
    %16 = vector.broadcast %14 : vector<16x1xf32> to vector<16x128xf32>
    %17 = vector.broadcast %15 : vector<1x128xf32> to vector<16x128xf32>
    %18 = arith.mulf %16, %17 : vector<16x128xf32>
    %19 = arith.addf %13, %18 : vector<16x128xf32>
    %20 = vector.extract_strided_slice %3 {offsets = [0, 2], sizes = [16, 1], strides = [1, 1]} : vector<16x4xf32> to vector<16x1xf32>
    %c2 = arith.constant 2 : index
    %c0_10 = arith.constant 0 : index
    %21 = vector.load %arg5[%c2, %c0_10] : memref<4x128xf32, #tpu.memory_space<vmem>>, vector<1x128xf32>
    %22 = vector.broadcast %20 : vector<16x1xf32> to vector<16x128xf32>
    %23 = vector.broadcast %21 : vector<1x128xf32> to vector<16x128xf32>
    %24 = arith.mulf %22, %23 : vector<16x128xf32>
    %25 = arith.addf %19, %24 : vector<16x128xf32>
    %26 = vector.extract_strided_slice %3 {offsets = [0, 3], sizes = [16, 1], strides = [1, 1]} : vector<16x4xf32> to vector<16x1xf32>
    %c3 = arith.constant 3 : index
    %c0_11 = arith.constant 0 : index
    %27 = vector.load %arg5[%c3, %c0_11] : memref<4x128xf32, #tpu.memory_space<vmem>>, vector<1x128xf32>
    %28 = vector.broadcast %26 : vector<16x1xf32> to vector<16x128xf32>
    %29 = vector.broadcast %27 : vector<1x128xf32> to vector<16x128xf32>
    %30 = arith.mulf %28, %29 : vector<16x128xf32>
    %31 = arith.addf %25, %30 : vector<16x128xf32>
    %32 = arith.addf %8, %31 : vector<16x128xf32>
    %c0_12 = arith.constant 0 : index
    %c0_13 = arith.constant 0 : index
    %33 = vector.load %arg6[%c0_12, %c0_13] : memref<1x128xf32, #tpu.memory_space<vmem>>, vector<1x128xf32>
    %34 = vector.broadcast %33 : vector<1x128xf32> to vector<16x128xf32>
    %35 = arith.addf %32, %34 : vector<16x128xf32>
    %c0_14 = arith.constant 0 : index
    %c0_15 = arith.constant 0 : index
    %36 = vector.load %arg7[%c0_14, %c0_15] : memref<1x128xf32, #tpu.memory_space<vmem>>, vector<1x128xf32>
    %37 = vector.broadcast %36 : vector<1x128xf32> to vector<16x128xf32>
    %38 = arith.addf %8, %37 : vector<16x128xf32>
    %39 = tpu.concatenate %35, %38 in 0 : vector<16x128xf32>, vector<16x128xf32> -> vector<32x128xf32>
    %c0_16 = arith.constant 0 : index
    %c0_17 = arith.constant 0 : index
    %c0_18 = arith.constant 0 : index
    %40 = vector.load %arg8[%c0_16, %c0_17, %c0_18] : memref<2x128x128xf32, #tpu.memory_space<vmem>>, vector<1x128x128xf32>
    %41 = vector.shape_cast %40 : vector<1x128x128xf32> to vector<128x128xf32>
    %cst_19 = arith.constant dense<0.000000e+00> : vector<32x128xf32>
    %42 = tpu.matmul %39, %41, %cst_19 {dimension_numbers = #tpu.dot_dimension_numbers<[1], [0], [0], [1], [0, 0, 1, 1], [], []>} : vector<32x128xf32>, vector<128x128xf32>, vector<32x128xf32> -> vector<32x128xf32>
    %c0_20 = arith.constant 0 : index
    %c0_21 = arith.constant 0 : index
    %c0_22 = arith.constant 0 : index
    %43 = vector.load %arg9[%c0_20, %c0_21, %c0_22] : memref<2x1x128xf32, #tpu.memory_space<vmem>>, vector<1x1x128xf32>
    %44 = vector.shape_cast %43 : vector<1x1x128xf32> to vector<1x128xf32>
    %45 = vector.broadcast %44 : vector<1x128xf32> to vector<32x128xf32>
    %46 = arith.addf %42, %45 : vector<32x128xf32>
    %cst_23 = arith.constant 5.000000e-01 : f32
    %47 = vector.broadcast %cst_23 : f32 to vector<32x128xf32>
    %48 = arith.mulf %47, %39 : vector<32x128xf32>
    %49 = math.tanh %46 : vector<32x128xf32>
    %cst_24 = arith.constant 5.000000e-01 : f32
    %50 = vector.broadcast %cst_24 : f32 to vector<32x128xf32>
    %51 = arith.mulf %50, %49 : vector<32x128xf32>
    %52 = arith.addf %48, %51 : vector<32x128xf32>
    %c1_25 = arith.constant 1 : index
    %c0_26 = arith.constant 0 : index
    %c0_27 = arith.constant 0 : index
    %53 = vector.load %arg8[%c1_25, %c0_26, %c0_27] : memref<2x128x128xf32, #tpu.memory_space<vmem>>, vector<1x128x128xf32>
    %54 = vector.shape_cast %53 : vector<1x128x128xf32> to vector<128x128xf32>
    %cst_28 = arith.constant dense<0.000000e+00> : vector<32x128xf32>
    %55 = tpu.matmul %52, %54, %cst_28 {dimension_numbers = #tpu.dot_dimension_numbers<[1], [0], [0], [1], [0, 0, 1, 1], [], []>} : vector<32x128xf32>, vector<128x128xf32>, vector<32x128xf32> -> vector<32x128xf32>
    %c1_29 = arith.constant 1 : index
    %c0_30 = arith.constant 0 : index
    %c0_31 = arith.constant 0 : index
    %56 = vector.load %arg9[%c1_29, %c0_30, %c0_31] : memref<2x1x128xf32, #tpu.memory_space<vmem>>, vector<1x1x128xf32>
    %57 = vector.shape_cast %56 : vector<1x1x128xf32> to vector<1x128xf32>
    %58 = vector.broadcast %57 : vector<1x128xf32> to vector<32x128xf32>
    %59 = arith.addf %55, %58 : vector<32x128xf32>
    %cst_32 = arith.constant 5.000000e-01 : f32
    %60 = vector.broadcast %cst_32 : f32 to vector<32x128xf32>
    %61 = arith.mulf %60, %52 : vector<32x128xf32>
    %62 = math.tanh %59 : vector<32x128xf32>
    %cst_33 = arith.constant 5.000000e-01 : f32
    %63 = vector.broadcast %cst_33 : f32 to vector<32x128xf32>
    %64 = arith.mulf %63, %62 : vector<32x128xf32>
    %65 = arith.addf %61, %64 : vector<32x128xf32>
    %c0_34 = arith.constant 0 : index
    %c0_35 = arith.constant 0 : index
    %66 = vector.load %arg10[%c0_34, %c0_35] : memref<128x4xf32, #tpu.memory_space<vmem>>, vector<128x4xf32>
    %cst_36 = arith.constant dense<0.000000e+00> : vector<32x4xf32>
    %67 = tpu.matmul %65, %66, %cst_36 {dimension_numbers = #tpu.dot_dimension_numbers<[1], [0], [0], [1], [0, 0, 1, 1], [], []>} : vector<32x128xf32>, vector<128x4xf32>, vector<32x4xf32> -> vector<32x4xf32>
    %c0_37 = arith.constant 0 : index
    %c0_38 = arith.constant 0 : index
    %68 = vector.load %arg11[%c0_37, %c0_38] : memref<1x4xf32, #tpu.memory_space<vmem>>, vector<1x4xf32>
    %69 = vector.broadcast %68 : vector<1x4xf32> to vector<32x4xf32>
    %70 = arith.addf %67, %69 : vector<32x4xf32>
    %cst_39 = arith.constant 0.000000e+00 : f32
    %71 = vector.broadcast %cst_39 : f32 to vector<32x4xf32>
    %72 = arith.subf %71, %70 : vector<32x4xf32>
    %73 = arith.negf %72 : vector<32x4xf32>
    %74 = math.exp %73 : vector<32x4xf32>
    %cst_40 = arith.constant 1.000000e+00 : f32
    %75 = vector.broadcast %cst_40 : f32 to vector<32x4xf32>
    %76 = arith.addf %75, %74 : vector<32x4xf32>
    %77 = arith.divf %75, %76 : vector<32x4xf32>
    %78 = vector.extract_strided_slice %77 {offsets = [0, 0], sizes = [16, 4], strides = [1, 1]} : vector<32x4xf32> to vector<16x4xf32>
    %79 = vector.extract_strided_slice %77 {offsets = [16, 0], sizes = [16, 4], strides = [1, 1]} : vector<32x4xf32> to vector<16x4xf32>
    %cst_41 = arith.constant dense<0.000000e+00> : vector<16xf32>
    %80 = vector.multi_reduction <add>, %79, %cst_41 [1] : vector<16x4xf32> to vector<16xf32>
    %81 = vector.shape_cast %80 : vector<16xf32> to vector<16x1xf32>
    %cst_42 = arith.constant 9.99999993E-9 : f32
    %82 = vector.broadcast %cst_42 : f32 to vector<16x1xf32>
    %83 = arith.addf %81, %82 : vector<16x1xf32>
    %84 = vector.broadcast %83 : vector<16x1xf32> to vector<16x4xf32>
    %85 = arith.divf %78, %84 : vector<16x4xf32>
    %c0_43 = arith.constant 0 : index
    %c0_44 = arith.constant 0 : index
    %86 = vector.load %arg12[%c0_43, %c0_44] : memref<16x4xf32, #tpu.memory_space<vmem>>, vector<16x4xf32>
    tpu.vector_store %arg12[%c0_43, %c0_44], %85 {strides = array<i32>} : memref<16x4xf32, #tpu.memory_space<vmem>>, vector<16x4xf32>,
    return
  }
  func.func @transform_0(%arg0: i32) -> (i32, i32) {
    %c0_i32 = arith.constant 0 : i32
    %c0_i32_0 = arith.constant 0 : i32
    return %arg0, %c0_i32 : i32, i32
  }
  func.func @transform_1(%arg0: i32) -> (i32, i32) {
    %c0_i32 = arith.constant 0 : i32
    %c0_i32_0 = arith.constant 0 : i32
    return %arg0, %c0_i32 : i32, i32
  }
  func.func @transform_2(%arg0: i32) -> (i32, i32) {
    %c0_i32 = arith.constant 0 : i32
    %c0_i32_0 = arith.constant 0 : i32
    %c0_i32_1 = arith.constant 0 : i32
    return %c0_i32, %c0_i32_0 : i32, i32
  }
  func.func @transform_3(%arg0: i32) -> (i32, i32) {
    %c0_i32 = arith.constant 0 : i32
    %c0_i32_0 = arith.constant 0 : i32
    %c0_i32_1 = arith.constant 0 : i32
    return %c0_i32, %c0_i32_0 : i32, i32
  }
  func.func @transform_4(%arg0: i32) -> (i32, i32) {
    %c0_i32 = arith.constant 0 : i32
    %c0_i32_0 = arith.constant 0 : i32
    %c0_i32_1 = arith.constant 0 : i32
    return %c0_i32, %c0_i32_0 : i32, i32
  }
  func.func @transform_5(%arg0: i32) -> (i32, i32) {
    %c0_i32 = arith.constant 0 : i32
    %c0_i32_0 = arith.constant 0 : i32
    %c0_i32_1 = arith.constant 0 : i32
    return %c0_i32, %c0_i32_0 : i32, i32
  }
  func.func @transform_6(%arg0: i32) -> (i32, i32) {
    %c0_i32 = arith.constant 0 : i32
    %c0_i32_0 = arith.constant 0 : i32
    %c0_i32_1 = arith.constant 0 : i32
    return %c0_i32, %c0_i32_0 : i32, i32
  }
  func.func @transform_7(%arg0: i32) -> (i32, i32, i32) {
    %c0_i32 = arith.constant 0 : i32
    %c0_i32_0 = arith.constant 0 : i32
    %c0_i32_1 = arith.constant 0 : i32
    %c0_i32_2 = arith.constant 0 : i32
    return %c0_i32, %c0_i32_0, %c0_i32_1 : i32, i32, i32
  }
  func.func @transform_8(%arg0: i32) -> (i32, i32, i32) {
    %c0_i32 = arith.constant 0 : i32
    %c0_i32_0 = arith.constant 0 : i32
    %c0_i32_1 = arith.constant 0 : i32
    %c0_i32_2 = arith.constant 0 : i32
    return %c0_i32, %c0_i32_0, %c0_i32_1 : i32, i32, i32
  }
  func.func @transform_9(%arg0: i32) -> (i32, i32) {
    %c0_i32 = arith.constant 0 : i32
    %c0_i32_0 = arith.constant 0 : i32
    %c0_i32_1 = arith.constant 0 : i32
    return %c0_i32, %c0_i32_0 : i32, i32
  }
  func.func @transform_10(%arg0: i32) -> (i32, i32) {
    %c0_i32 = arith.constant 0 : i32
    %c0_i32_0 = arith.constant 0 : i32
    %c0_i32_1 = arith.constant 0 : i32
    return %c0_i32, %c0_i32_0 : i32, i32
  }
  func.func @transform_11(%arg0: i32) -> (i32, i32) {
    %c0_i32 = arith.constant 0 : i32
    %c0_i32_0 = arith.constant 0 : i32
    return %arg0, %c0_i32 : i32, i32
  }
}

</mosaic_0001>

<llo_original>
// kernel: tile.38
$region0: #{tile.38}
  #allocation0 [shape = 's32[1]{0}', space=sflag, size = 0x4, scoped, tag = 'scoped memory for tile.38']
  %s0 = inlined_call_operand.vmem [shape: f32[32], index: 0, kind: input, shape index: {}]
  %s1 = inlined_call_operand.vmem [shape: f32[4,32], index: 1, kind: output, shape index: {}]
  // Predicated region
  $region2: #{tile.38} parent=0 // pred_check
    _
  $region3: #{tile.38} parent=0 // pred_check_branch
    %3 = sbr.rel (0) target = $region5
  $region4: #{tile.38} parent=0 // pred_region
    _
  $region5: #{tile.38} parent=0 // pred_fallthru
    _
  %v4 = vld [vmem:[%s0] ss:$0 sm:$0xff]
  %5 = vst [vmem:[%s1] sm:$0xf] %v4

// kernel: tile.39
$region0: #{tile.39}
  %s0 = inlined_call_operand.vmem [shape: f32[4,32], index: 0, kind: input, shape index: {}]
  %s1 = inlined_call_operand.vmem [shape: f32[1,128], index: 1, kind: output, shape index: {}]
  $region1: #{tile.39} parent=0
    #allocation0 [shape = 'u8[4096]{0}', space=vmem, size = 0x1000, scoped, tag = 'scoped mem for output reshape']
    #allocation1 [shape = 'u8[4096]{0}', space=vmem, size = 0x1000, scoped, tag = 'scoped mem for input reshape']
    %s3 = sshllo.u32 0, 4
    %v4 = vld [vmem:[%s0] sm:%s3]
    %5 = vst [vmem:[#allocation1] sm:%s3] %v4
    %v6 = vld [vmem:[#allocation1] sm:$0x1]
    %vm7 = vcmask 261120
    %8 = vst.msk [vmem:[#allocation0] sm:$0x1] %vm7, %v6
    %s9 = scalar_lea.vmem [#allocation1], 3
    %v10 = vld [vmem:[%s9] sm:$0x1]
    %11 = vrot.lane.b32.xlu0 %v10, 96
    %v12 = vpop.permute.xlu0 %11
    %vm13 = vcmask 1048320
    %14 = vst.msk [vmem:[#allocation0] sm:$0x1] %vm13, %v12
    %s15 = scalar_lea.vmem [#allocation1], 2
    %v16 = vld [vmem:[%s15] sm:$0x1]
    %17 = vrot.lane.b32.xlu0 %v16, 64
    %v18 = vpop.permute.xlu0 %17
    %vm19 = vcmask 785920
    %20 = vst.msk [vmem:[#allocation0] sm:$0x1] %vm19, %v18
    %s21 = scalar_lea.vmem [#allocation1], 1
    %v22 = vld [vmem:[%s21] sm:$0x1]
    %23 = vrot.lane.b32.xlu0 %v22, 32
    %v24 = vpop.permute.xlu0 %23
    %vm25 = vcmask 523520
    %26 = vst.msk [vmem:[#allocation0] sm:$0x1] %vm25, %v24
    %s28 = sshllo.u32 0, 1
    %v30 = vld [vmem:[#allocation0] sm:%s28]
    %s31 = sshllo.u32 0, 1
    %32 = vst [vmem:[%s1] sm:%s31] %v30

// kernel: custom-call.4
$region0: #{custom-call.4}
  %s0 = inlined_call_operand.vmem [shape: bf16[8,2,32], index: 0, kind: output, shape index: {}]

// kernel: custom-call.1
$region0: #{custom-call.1}
  %s0 = inlined_call_operand.vmem [shape: f32[2,32], index: 0, kind: output, shape index: {}]

// kernel: custom-call
$region0: #{custom-call}
  %s0 = inlined_call_operand.vmem [shape: bf16[2,32], index: 0, kind: output, shape index: {}]

// kernel: tile.29
$region0: #{tile.29}
  %s0 = inlined_call_operand.vmem [shape: f32[32,4,32], index: 0, kind: input, shape index: {}]
  %s1 = inlined_call_operand.vmem [shape: f32[32,128], index: 1, kind: output, shape index: {}]
  $region1: #{tile.29} parent=0
    #allocation0 [shape = 'u8[131072]{0}', space=vmem, size = 0x20000, scoped, tag = 'scoped mem for input reshape']
    %s3 = sshllo.u32 0, 4
    %s4 = smul.addr 4, 31
    %s5 = scalar_lea.vmem %s0, %s4
    %v6 = vld [vmem:[%s5] sm:%s3]
    %s7 = scalar_lea.vmem [#allocation0], 248
    %8 = vst [vmem:[%s7] sm:%s3] %v6
    %s9 = smul.addr 4, 30
    %s10 = scalar_lea.vmem %s0, %s9
    %v11 = vld [vmem:[%s10] sm:%s3]
    %s12 = scalar_lea.vmem [#allocation0], 240
    %13 = vst [vmem:[%s12] sm:%s3] %v11
    %s14 = smul.addr 4, 29
    %s15 = scalar_lea.vmem %s0, %s14
    %v16 = vld [vmem:[%s15] sm:%s3]
    %s17 = scalar_lea.vmem [#allocation0], 232
    %18 = vst [vmem:[%s17] sm:%s3] %v16
    %s19 = smul.addr 4, 28
    %s20 = scalar_lea.vmem %s0, %s19
    %v21 = vld [vmem:[%s20] sm:%s3]
    %s22 = scalar_lea.vmem [#allocation0], 224
    %23 = vst [vmem:[%s22] sm:%s3] %v21
    %s24 = smul.addr 4, 27
    %s25 = scalar_lea.vmem %s0, %s24
    %v26 = vld [vmem:[%s25] sm:%s3]
    %s27 = scalar_lea.vmem [#allocation0], 216
    %28 = vst [vmem:[%s27] sm:%s3] %v26
    %s29 = smul.addr 4, 26
    %s30 = scalar_lea.vmem %s0, %s29
    %v31 = vld [vmem:[%s30] sm:%s3]
    %s32 = scalar_lea.vmem [#allocation0], 208
    %33 = vst [vmem:[%s32] sm:%s3] %v31
    %s34 = smul.addr 4, 25
    %s35 = scalar_lea.vmem %s0, %s34
    %v36 = vld [vmem:[%s35] sm:%s3]
    %s37 = scalar_lea.vmem [#allocation0], 200
    %38 = vst [vmem:[%s37] sm:%s3] %v36
    %s39 = smul.addr 4, 24
    %s40 = scalar_lea.vmem %s0, %s39
    %v41 = vld [vmem:[%s40] sm:%s3]
    %s42 = scalar_lea.vmem [#allocation0], 192
    %43 = vst [vmem:[%s42] sm:%s3] %v41
    %s44 = smul.addr 4, 23
    %s45 = scalar_lea.vmem %s0, %s44
    %v46 = vld [vmem:[%s45] sm:%s3]
    %s47 = scalar_lea.vmem [#allocation0], 184
    %48 = vst [vmem:[%s47] sm:%s3] %v46
    %s49 = smul.addr 4, 22
    %s50 = scalar_lea.vmem %s0, %s49
    %v51 = vld [vmem:[%s50] sm:%s3]
    %s52 = scalar_lea.vmem [#allocation0], 176
    %53 = vst [vmem:[%s52] sm:%s3] %v51
    %s54 = smul.addr 4, 21
    %s55 = scalar_lea.vmem %s0, %s54
    %v56 = vld [vmem:[%s55] sm:%s3]
    %s57 = scalar_lea.vmem [#allocation0], 168
    %58 = vst [vmem:[%s57] sm:%s3] %v56
    %s59 = smul.addr 4, 20
    %s60 = scalar_lea.vmem %s0, %s59
    %v61 = vld [vmem:[%s60] sm:%s3]
    %s62 = scalar_lea.vmem [#allocation0], 160
    %63 = vst [vmem:[%s62] sm:%s3] %v61
    %s64 = smul.addr 4, 19
    %s65 = scalar_lea.vmem %s0, %s64
    %v66 = vld [vmem:[%s65] sm:%s3]
    %s67 = scalar_lea.vmem [#allocation0], 152
    %68 = vst [vmem:[%s67] sm:%s3] %v66
    %s69 = smul.addr 4, 18
    %s70 = scalar_lea.vmem %s0, %s69
    %v71 = vld [vmem:[%s70] sm:%s3]
    %s72 = scalar_lea.vmem [#allocation0], 144
    %73 = vst [vmem:[%s72] sm:%s3] %v71
    %s74 = smul.addr 4, 17
    %s75 = scalar_lea.vmem %s0, %s74
    %v76 = vld [vmem:[%s75] sm:%s3]
    %s77 = scalar_lea.vmem [#allocation0], 136
    %78 = vst [vmem:[%s77] sm:%s3] %v76
    %s79 = smul.addr 4, 16
    %s80 = scalar_lea.vmem %s0, %s79
    %v81 = vld [vmem:[%s80] sm:%s3]
    %s82 = scalar_lea.vmem [#allocation0], 128
    %83 = vst [vmem:[%s82] sm:%s3] %v81
    %s84 = smul.addr 4, 15
    %s85 = scalar_lea.vmem %s0, %s84
    %v86 = vld [vmem:[%s85] sm:%s3]
    %s87 = scalar_lea.vmem [#allocation0], 120
    %88 = vst [vmem:[%s87] sm:%s3] %v86
    %s89 = smul.addr 4, 14
    %s90 = scalar_lea.vmem %s0, %s89
    %v91 = vld [vmem:[%s90] sm:%s3]
    %s92 = scalar_lea.vmem [#allocation0], 112
    %93 = vst [vmem:[%s92] sm:%s3] %v91
    %s94 = smul.addr 4, 13
    %s95 = scalar_lea.vmem %s0, %s94
    %v96 = vld [vmem:[%s95] sm:%s3]
    %s97 = scalar_lea.vmem [#allocation0], 104
    %98 = vst [vmem:[%s97] sm:%s3] %v96
    %s99 = smul.addr 4, 12
    %s100 = scalar_lea.vmem %s0, %s99
    %v101 = vld [vmem:[%s100] sm:%s3]
    %s102 = scalar_lea.vmem [#allocation0], 96
    %103 = vst [vmem:[%s102] sm:%s3] %v101
    %s104 = smul.addr 4, 11
    %s105 = scalar_lea.vmem %s0, %s104
    %v106 = vld [vmem:[%s105] sm:%s3]
    %s107 = scalar_lea.vmem [#allocation0], 88
    %108 = vst [vmem:[%s107] sm:%s3] %v106
    %s109 = smul.addr 4, 10
    %s110 = scalar_lea.vmem %s0, %s109
    %v111 = vld [vmem:[%s110] sm:%s3]
    %s112 = scalar_lea.vmem [#allocation0], 80
    %113 = vst [vmem:[%s112] sm:%s3] %v111
    %s114 = smul.addr 4, 9
    %s115 = scalar_lea.vmem %s0, %s114
    %v116 = vld [vmem:[%s115] sm:%s3]
    %s117 = scalar_lea.vmem [#allocation0], 72
    %118 = vst [vmem:[%s117] sm:%s3] %v116
    %s119 = smul.addr 4, 8
    %s120 = scalar_lea.vmem %s0, %s119
    %v121 = vld [vmem:[%s120] sm:%s3]
    %s122 = scalar_lea.vmem [#allocation0], 64
    %123 = vst [vmem:[%s122] sm:%s3] %v121
    %s124 = smul.addr 4, 7
    %s125 = scalar_lea.vmem %s0, %s124
    %v126 = vld [vmem:[%s125] sm:%s3]
    %s127 = scalar_lea.vmem [#allocation0], 56
    %128 = vst [vmem:[%s127] sm:%s3] %v126
    %s129 = smul.addr 4, 6
    %s130 = scalar_lea.vmem %s0, %s129
    %v131 = vld [vmem:[%s130] sm:%s3]
    %s132 = scalar_lea.vmem [#allocation0], 48
    %133 = vst [vmem:[%s132] sm:%s3] %v131
    %s134 = smul.addr 4, 5
    %s135 = scalar_lea.vmem %s0, %s134
    %v136 = vld [vmem:[%s135] sm:%s3]
    %s137 = scalar_lea.vmem [#allocation0], 40
    %138 = vst [vmem:[%s137] sm:%s3] %v136
    %s139 = smul.addr 4, 4
    %s140 = scalar_lea.vmem %s0, %s139
    %v141 = vld [vmem:[%s140] sm:%s3]
    %s142 = scalar_lea.vmem [#allocation0], 32
    %143 = vst [vmem:[%s142] sm:%s3] %v141
    %s144 = smul.addr 4, 3
    %s145 = scalar_lea.vmem %s0, %s144
    %v146 = vld [vmem:[%s145] sm:%s3]
    %s147 = scalar_lea.vmem [#allocation0], 24
    %148 = vst [vmem:[%s147] sm:%s3] %v146
    %s149 = smul.addr 4, 2
    %s150 = scalar_lea.vmem %s0, %s149
    %v151 = vld [vmem:[%s150] sm:%s3]
    %s152 = scalar_lea.vmem [#allocation0], 16
    %153 = vst [vmem:[%s152] sm:%s3] %v151
    %s154 = scalar_lea.vmem %s0, 4
    %v155 = vld [vmem:[%s154] sm:%s3]
    %s156 = scalar_lea.vmem [#allocation0], 8
    %157 = vst [vmem:[%s156] sm:%s3] %v155
    %v158 = vld [vmem:[%s0] sm:%s3]
    %159 = vst [vmem:[#allocation0] sm:%s3] %v158
    %v160 = vld [vmem:[#allocation0] ss:$8 sm:$0xf]
    %v161 = vld [vmem:[#allocation0] ss:$8 sm:$0xf0]
    %vm162 = vcmask 1047556
    %v163 = vsel %vm162, %v161, %v160
    %vm164 = vcmask 261120
    %165 = vst.msk [vmem:[%s1] sm:$0xff] %vm164, %v163
    %s166 = scalar_lea.vmem [#allocation0], 64
    %v167 = vld [vmem:[%s166] ss:$8 sm:$0xf]
    %s168 = scalar_lea.vmem [#allocation0], 64
    %v169 = vld [vmem:[%s168] ss:$8 sm:$0xf0]
    %vm170 = vcmask 1047556
    %v171 = vsel %vm170, %v169, %v167
    %vm172 = vcmask 261120
    %s173 = scalar_lea.vmem %s1, 8
    %174 = vst.msk [vmem:[%s173] sm:$0xff] %vm172, %v171
    %s175 = scalar_lea.vmem [#allocation0], 128
    %v176 = vld [vmem:[%s175] ss:$8 sm:$0xf]
    %s177 = scalar_lea.vmem [#allocation0], 128
    %v178 = vld [vmem:[%s177] ss:$8 sm:$0xf0]
    %vm179 = vcmask 1047556
    %v180 = vsel %vm179, %v178, %v176
    %vm181 = vcmask 261120
    %s182 = scalar_lea.vmem %s1, 16
    %183 = vst.msk [vmem:[%s182] sm:$0xff] %vm181, %v180
    %s184 = scalar_lea.vmem [#allocation0], 192
    %v185 = vld [vmem:[%s184] ss:$8 sm:$0xf]
    %s186 = scalar_lea.vmem [#allocation0], 192
    %v187 = vld [vmem:[%s186] ss:$8 sm:$0xf0]
    %vm188 = vcmask 1047556
    %v189 = vsel %vm188, %v187, %v185
    %vm190 = vcmask 261120
    %s191 = scalar_lea.vmem %s1, 24
    %192 = vst.msk [vmem:[%s191] sm:$0xff] %vm190, %v189
    %s193 = scalar_lea.vmem [#allocation0], 3
    %v194 = vld [vmem:[%s193] ss:$8 sm:$0xf]
    %s195 = scalar_lea.vmem [#allocation0], 3
    %v196 = vld [vmem:[%s195] ss:$8 sm:$0xf0]
    %vm197 = vcmask 1047556
    %v198 = vsel %vm197, %v196, %v194
    %199 = vrot.lane.b32.xlu0 %v198, 96
    %v200 = vpop.permute.xlu0 %199
    %vm201 = vcmask 1048320
    %202 = vst.msk [vmem:[%s1] sm:$0xff] %vm201, %v200
    %s203 = scalar_lea.vmem [#allocation0], 67
    %v204 = vld [vmem:[%s203] ss:$8 sm:$0xf]
    %s205 = scalar_lea.vmem [#allocation0], 67
    %v206 = vld [vmem:[%s205] ss:$8 sm:$0xf0]
    %vm207 = vcmask 1047556
    %v208 = vsel %vm207, %v206, %v204
    %209 = vrot.lane.b32.xlu0 %v208, 96
    %v210 = vpop.permute.xlu0 %209
    %vm211 = vcmask 1048320
    %s212 = scalar_lea.vmem %s1, 8
    %213 = vst.msk [vmem:[%s212] sm:$0xff] %vm211, %v210
    %s214 = scalar_lea.vmem [#allocation0], 131
    %v215 = vld [vmem:[%s214] ss:$8 sm:$0xf]
    %s216 = scalar_lea.vmem [#allocation0], 131
    %v217 = vld [vmem:[%s216] ss:$8 sm:$0xf0]
    %vm218 = vcmask 1047556
    %v219 = vsel %vm218, %v217, %v215
    %220 = vrot.lane.b32.xlu0 %v219, 96
    %v221 = vpop.permute.xlu0 %220
    %vm222 = vcmask 1048320
    %s223 = scalar_lea.vmem %s1, 16
    %224 = vst.msk [vmem:[%s223] sm:$0xff] %vm222, %v221
    %s225 = scalar_lea.vmem [#allocation0], 195
    %v226 = vld [vmem:[%s225] ss:$8 sm:$0xf]
    %s227 = scalar_lea.vmem [#allocation0], 195
    %v228 = vld [vmem:[%s227] ss:$8 sm:$0xf0]
    %vm229 = vcmask 1047556
    %v230 = vsel %vm229, %v228, %v226
    %231 = vrot.lane.b32.xlu0 %v230, 96
    %v232 = vpop.permute.xlu0 %231
    %vm233 = vcmask 1048320
    %s234 = scalar_lea.vmem %s1, 24
    %235 = vst.msk [vmem:[%s234] sm:$0xff] %vm233, %v232
    %s236 = scalar_lea.vmem [#allocation0], 2
    %v237 = vld [vmem:[%s236] ss:$8 sm:$0xf]
    %s238 = scalar_lea.vmem [#allocation0], 2
    %v239 = vld [vmem:[%s238] ss:$8 sm:$0xf0]
    %vm240 = vcmask 1047556
    %v241 = vsel %vm240, %v239, %v237
    %242 = vrot.lane.b32.xlu0 %v241, 64
    %v243 = vpop.permute.xlu0 %242
    %vm244 = vcmask 785920
    %245 = vst.msk [vmem:[%s1] sm:$0xff] %vm244, %v243
    %s246 = scalar_lea.vmem [#allocation0], 66
    %v247 = vld [vmem:[%s246] ss:$8 sm:$0xf]
    %s248 = scalar_lea.vmem [#allocation0], 66
    %v249 = vld [vmem:[%s248] ss:$8 sm:$0xf0]
    %vm250 = vcmask 1047556
    %v251 = vsel %vm250, %v249, %v247
    %252 = vrot.lane.b32.xlu0 %v251, 64
    %v253 = vpop.permute.xlu0 %252
    %vm254 = vcmask 785920
    %s255 = scalar_lea.vmem %s1, 8
    %256 = vst.msk [vmem:[%s255] sm:$0xff] %vm254, %v253
    %s257 = scalar_lea.vmem [#allocation0], 130
    %v258 = vld [vmem:[%s257] ss:$8 sm:$0xf]
    %s259 = scalar_lea.vmem [#allocation0], 130
    %v260 = vld [vmem:[%s259] ss:$8 sm:$0xf0]
    %vm261 = vcmask 1047556
    %v262 = vsel %vm261, %v260, %v258
    %263 = vrot.lane.b32.xlu0 %v262, 64
    %v264 = vpop.permute.xlu0 %263
    %vm265 = vcmask 785920
    %s266 = scalar_lea.vmem %s1, 16
    %267 = vst.msk [vmem:[%s266] sm:$0xff] %vm265, %v264
    %s268 = scalar_lea.vmem [#allocation0], 194
    %v269 = vld [vmem:[%s268] ss:$8 sm:$0xf]
    %s270 = scalar_lea.vmem [#allocation0], 194
    %v271 = vld [vmem:[%s270] ss:$8 sm:$0xf0]
    %vm272 = vcmask 1047556
    %v273 = vsel %vm272, %v271, %v269
    %274 = vrot.lane.b32.xlu0 %v273, 64
    %v275 = vpop.permute.xlu0 %274
    %vm276 = vcmask 785920
    %s277 = scalar_lea.vmem %s1, 24
    %278 = vst.msk [vmem:[%s277] sm:$0xff] %vm276, %v275
    %s279 = scalar_lea.vmem [#allocation0], 1
    %v280 = vld [vmem:[%s279] ss:$8 sm:$0xf]
    %s281 = scalar_lea.vmem [#allocation0], 1
    %v282 = vld [vmem:[%s281] ss:$8 sm:$0xf0]
    %vm283 = vcmask 1047556
    %v284 = vsel %vm283, %v282, %v280
    %285 = vrot.lane.b32.xlu0 %v284, 32
    %v286 = vpop.permute.xlu0 %285
    %vm287 = vcmask 523520
    %288 = vst.msk [vmem:[%s1] sm:$0xff] %vm287, %v286
    %s289 = scalar_lea.vmem [#allocation0], 65
    %v290 = vld [vmem:[%s289] ss:$8 sm:$0xf]
    %s291 = scalar_lea.vmem [#allocation0], 65
    %v292 = vld [vmem:[%s291] ss:$8 sm:$0xf0]
    %vm293 = vcmask 1047556
    %v294 = vsel %vm293, %v292, %v290
    %295 = vrot.lane.b32.xlu0 %v294, 32
    %v296 = vpop.permute.xlu0 %295
    %vm297 = vcmask 523520
    %s298 = scalar_lea.vmem %s1, 8
    %299 = vst.msk [vmem:[%s298] sm:$0xff] %vm297, %v296
    %s300 = scalar_lea.vmem [#allocation0], 129
    %v301 = vld [vmem:[%s300] ss:$8 sm:$0xf]
    %s302 = scalar_lea.vmem [#allocation0], 129
    %v303 = vld [vmem:[%s302] ss:$8 sm:$0xf0]
    %vm304 = vcmask 1047556
    %v305 = vsel %vm304, %v303, %v301
    %306 = vrot.lane.b32.xlu0 %v305, 32
    %v307 = vpop.permute.xlu0 %306
    %vm308 = vcmask 523520
    %s309 = scalar_lea.vmem %s1, 16
    %310 = vst.msk [vmem:[%s309] sm:$0xff] %vm308, %v307
    %s311 = scalar_lea.vmem [#allocation0], 193
    %v312 = vld [vmem:[%s311] ss:$8 sm:$0xf]
    %s313 = scalar_lea.vmem [#allocation0], 193
    %v314 = vld [vmem:[%s313] ss:$8 sm:$0xf0]
    %vm315 = vcmask 1047556
    %v316 = vsel %vm315, %v314, %v312
    %317 = vrot.lane.b32.xlu0 %v316, 32
    %v318 = vpop.permute.xlu0 %317
    %vm319 = vcmask 523520
    %s320 = scalar_lea.vmem %s1, 24
    %321 = vst.msk [vmem:[%s320] sm:$0xff] %vm319, %v318

// kernel: tile.48
$region0: #{tile.48}
  %s0 = inlined_call_operand.vmem [shape: f32[4,32], index: 0, kind: input, shape index: {}]
  %s1 = inlined_call_operand.vmem [shape: f32[1,1,128], index: 1, kind: output, shape index: {}]
  $region1: #{tile.48} parent=0
    #allocation0 [shape = 'u8[4096]{0}', space=vmem, size = 0x1000, scoped, tag = 'scoped mem for output reshape']
    #allocation1 [shape = 'u8[4096]{0}', space=vmem, size = 0x1000, scoped, tag = 'scoped mem for input reshape']
    %s3 = sshllo.u32 0, 4
    %v4 = vld [vmem:[%s0] sm:%s3]
    %5 = vst [vmem:[#allocation1] sm:%s3] %v4
    %v6 = vld [vmem:[#allocation1] sm:$0x1]
    %vm7 = vcmask 261120
    %8 = vst.msk [vmem:[#allocation0] sm:$0x1] %vm7, %v6
    %s9 = scalar_lea.vmem [#allocation1], 3
    %v10 = vld [vmem:[%s9] sm:$0x1]
    %11 = vrot.lane.b32.xlu0 %v10, 96
    %v12 = vpop.permute.xlu0 %11
    %vm13 = vcmask 1048320
    %14 = vst.msk [vmem:[#allocation0] sm:$0x1] %vm13, %v12
    %s15 = scalar_lea.vmem [#allocation1], 2
    %v16 = vld [vmem:[%s15] sm:$0x1]
    %17 = vrot.lane.b32.xlu0 %v16, 64
    %v18 = vpop.permute.xlu0 %17
    %vm19 = vcmask 785920
    %20 = vst.msk [vmem:[#allocation0] sm:$0x1] %vm19, %v18
    %s21 = scalar_lea.vmem [#allocation1], 1
    %v22 = vld [vmem:[%s21] sm:$0x1]
    %23 = vrot.lane.b32.xlu0 %v22, 32
    %v24 = vpop.permute.xlu0 %23
    %vm25 = vcmask 523520
    %26 = vst.msk [vmem:[#allocation0] sm:$0x1] %vm25, %v24
    %s28 = sshllo.u32 0, 1
    %v30 = vld [vmem:[#allocation0] sm:%s28]
    %s31 = sshllo.u32 0, 1
    %32 = vst [vmem:[%s1] sm:%s31] %v30

// kernel: ifib_forward.1
$region0: #{ifib_forward.1}
  #allocation0 [shape = 'u32[]', space=smem, size = 0x4, offset = 0x4, fixed_abs, tag = 'smem constant byte address 0x4 - core index']
  #allocation1 [shape = 'u32[144,128]{1,0:T(1,128)}', space=vmem, size = 0x12000, scoped, tag = 'internal scratch']
  %s0 = inlined_call_operand.vmem [shape: bf16[16,32], index: 0, kind: input, shape index: {}]
  %s1 = inlined_call_operand.vmem [shape: bf16[16,4], index: 1, kind: input, shape index: {}]
  %s2 = inlined_call_operand.vmem [shape: f32[32,128], index: 2, kind: input, shape index: {}]
  %s3 = inlined_call_operand.vmem [shape: f32[1,128], index: 3, kind: input, shape index: {}]
  %s4 = inlined_call_operand.vmem [shape: f32[4,128], index: 4, kind: input, shape index: {}]
  %s5 = inlined_call_operand.vmem [shape: f32[1,128], index: 5, kind: input, shape index: {}]
  %s6 = inlined_call_operand.vmem [shape: f32[1,128], index: 6, kind: input, shape index: {}]
  %s7 = inlined_call_operand.vmem [shape: f32[2,128,128], index: 7, kind: input, shape index: {}]
  %s8 = inlined_call_operand.vmem [shape: f32[2,1,128], index: 8, kind: input, shape index: {}]
  %s9 = inlined_call_operand.vmem [shape: f32[128,4], index: 9, kind: input, shape index: {}]
  %s10 = inlined_call_operand.vmem [shape: f32[1,4], index: 10, kind: input, shape index: {}]
  %s11 = inlined_call_operand.vmem [shape: f32[16,4], index: 11, kind: output, shape index: {}]
  %s12 = sld [smem:[#allocation0]]
  $region54: #{ifib_forward.1} parent=0
    _
  %s14 = ssub.s32 1, %s12
  %s15 = scalar_select 0, %s14, %s12
  // Predicated region
  $region2: #{ifib_forward.1} parent=0 // pred_check
    _
  $region3: #{ifib_forward.1} parent=0 // pred_check_branch
    %17 = sbr.rel (0) target = $region5
  $region4: #{ifib_forward.1} parent=0 // pred_region
    _
  $region5: #{ifib_forward.1} parent=0 // pred_fallthru
    _
  // Predicated region
  $region6: #{ifib_forward.1} parent=0 // pred_check
    _
  $region7: #{ifib_forward.1} parent=0 // pred_check_branch
    %19 = sbr.rel (0) target = $region9
  $region8: #{ifib_forward.1} parent=0 // pred_region
    _
  $region9: #{ifib_forward.1} parent=0 // pred_fallthru
    _
  // Predicated region
  $region10: #{ifib_forward.1} parent=0 // pred_check
    _
  $region11: #{ifib_forward.1} parent=0 // pred_check_branch
    %21 = sbr.rel (0) target = $region13
  $region12: #{ifib_forward.1} parent=0 // pred_region
    _
  $region13: #{ifib_forward.1} parent=0 // pred_fallthru
    _
  // Predicated region
  $region14: #{ifib_forward.1} parent=0 // pred_check
    _
  $region15: #{ifib_forward.1} parent=0 // pred_check_branch
    %23 = sbr.rel (0) target = $region17
  $region16: #{ifib_forward.1} parent=0 // pred_region
    _
  $region17: #{ifib_forward.1} parent=0 // pred_fallthru
    _
  // Predicated region
  $region18: #{ifib_forward.1} parent=0 // pred_check
    _
  $region19: #{ifib_forward.1} parent=0 // pred_check_branch
    %25 = sbr.rel (0) target = $region21
  $region20: #{ifib_forward.1} parent=0 // pred_region
    _
  $region21: #{ifib_forward.1} parent=0 // pred_fallthru
    _
  // Predicated region
  $region22: #{ifib_forward.1} parent=0 // pred_check
    _
  $region23: #{ifib_forward.1} parent=0 // pred_check_branch
    %27 = sbr.rel (0) target = $region25
  $region24: #{ifib_forward.1} parent=0 // pred_region
    _
  $region25: #{ifib_forward.1} parent=0 // pred_fallthru
    _
  // Predicated region
  $region26: #{ifib_forward.1} parent=0 // pred_check
    _
  $region27: #{ifib_forward.1} parent=0 // pred_check_branch
    %29 = sbr.rel (0) target = $region29
  $region28: #{ifib_forward.1} parent=0 // pred_region
    _
  $region29: #{ifib_forward.1} parent=0 // pred_fallthru
    _
  // Predicated region
  $region30: #{ifib_forward.1} parent=0 // pred_check
    _
  $region31: #{ifib_forward.1} parent=0 // pred_check_branch
    %31 = sbr.rel (0) target = $region33
  $region32: #{ifib_forward.1} parent=0 // pred_region
    _
  $region33: #{ifib_forward.1} parent=0 // pred_fallthru
    _
  // Predicated region
  $region34: #{ifib_forward.1} parent=0 // pred_check
    _
  $region35: #{ifib_forward.1} parent=0 // pred_check_branch
    %33 = sbr.rel (0) target = $region37
  $region36: #{ifib_forward.1} parent=0 // pred_region
    _
  $region37: #{ifib_forward.1} parent=0 // pred_fallthru
    _
  // Predicated region
  $region38: #{ifib_forward.1} parent=0 // pred_check
    _
  $region39: #{ifib_forward.1} parent=0 // pred_check_branch
    %35 = sbr.rel (0) target = $region41
  $region40: #{ifib_forward.1} parent=0 // pred_region
    _
  $region41: #{ifib_forward.1} parent=0 // pred_fallthru
    _
  // Predicated region
  $region42: #{ifib_forward.1} parent=0 // pred_check
    _
  $region43: #{ifib_forward.1} parent=0 // pred_check_branch
    %37 = sbr.rel (0) target = $region45
  $region44: #{ifib_forward.1} parent=0 // pred_region
    _
  $region45: #{ifib_forward.1} parent=0 // pred_fallthru
    _
  %v38 = vld [vmem:[%s0] sm:$0xf]
  %v39 = vld [vmem:[%s0 + $0x4] sm:$0xf]
  %v40 = vunpack.c.l.bf16 %v38
  %v41 = vunpack.c.l.bf16 %v39
  %v42 = vld [vmem:[%s1] sm:$0xf]
  %v43 = vld [vmem:[%s1 + $0x4] sm:$0xf]
  %v44 = vunpack.c.l.bf16 %v42
  %v45 = vunpack.c.l.bf16 %v43
  %v46 = vld [vmem:[%s2] sm:$0xff]
  %v47 = vld [vmem:[%s2 + $0x8] sm:$0xff]
  %v48 = vld [vmem:[%s2 + $0x10] sm:$0xff]
  %v49 = vld [vmem:[%s2 + $0x18] sm:$0xff]
  %v50 = vld [vmem:[%s3] sm:$0x1]
  %v52 = vlaneseq
  %v53 = vshrl.u32 %v52, 7
  %v54 = vsub.s32 0, %v53
  %v55 = vrot.slane %v50, %v54
  %vm57 = vcmask 261120
  %v59 = vsel %vm57, %v40, 0
  %v62 = vsel %vm57, %v41, 0
  %64 = vmatprep.subr.mxu0 0.0
  %65 = vmatpush1.msra.mxu0 %v46
  %66 = vmatprep.subr.mxu0 0.0
  %67 = vmatpush1.msra.mxu0 %v47
  %68 = vmatprep.subr.mxu0 0.0
  %69 = vmatpush1.msra.mxu0 %v48
  %70 = vmatprep.subr.mxu0 0.0
  %71 = vmatpush1.msra.mxu0 %v49
  %72 = vmatprep.subr.mxu0 0.0
  %73 = vmatpush1.msra.mxu0 0.0
  %74 = vmatprep.subr.mxu0 0.0
  %75 = vmatpush1.msra.mxu0 0.0
  %76 = vmatprep.subr.mxu0 0.0
  %77 = vmatpush1.msra.mxu0 0.0
  %78 = vmatprep.subr.mxu0 0.0
  %79 = vmatpush1.msra.mxu0 0.0
  %80 = vmatprep.subr.mxu0 0.0
  %81 = vmatpush1.msra.mxu0 0.0
  %82 = vmatprep.subr.mxu0 0.0
  %83 = vmatpush1.msra.mxu0 0.0
  %84 = vmatprep.subr.mxu0 0.0
  %85 = vmatpush1.msra.mxu0 0.0
  %86 = vmatprep.subr.mxu0 0.0
  %87 = vmatpush1.msra.mxu0 0.0
  %88 = vmatprep.subr.mxu0 0.0
  %89 = vmatpush1.msra.mxu0 0.0
  %90 = vmatprep.subr.mxu0 0.0
  %91 = vmatpush1.msra.mxu0 0.0
  %92 = vmatprep.subr.mxu0 0.0
  %93 = vmatpush1.msra.mxu0 0.0
  %94 = vmatprep.subr.mxu0 0.0
  %95 = vmatpush1.msra.mxu0 0.0
  %96 = vmatprep.subr.mxu0 0.0
  %97 = vmatpush1.msra.mxu0 0.0
  %98 = vmatprep.subr.mxu0 0.0
  %99 = vmatpush1.msra.mxu0 0.0
  %100 = vmatprep.subr.mxu0 0.0
  %101 = vmatpush1.msra.mxu0 0.0
  %102 = vmatprep.subr.mxu0 0.0
  %103 = vmatpush1.msra.mxu0 0.0
  %104 = vmatprep.subr.mxu0 0.0
  %105 = vmatpush1.msra.mxu0 0.0
  %106 = vmatprep.subr.mxu0 0.0
  %107 = vmatpush1.msra.mxu0 0.0
  %108 = vmatprep.subr.mxu0 0.0
  %109 = vmatpush1.msra.mxu0 0.0
  %110 = vmatprep.subr.mxu0 0.0
  %111 = vmatpush1.msra.mxu0 0.0
  %112 = vmatprep.subr.mxu0 0.0
  %113 = vmatpush1.msra.mxu0 0.0
  %114 = vmatprep.subr.mxu0 0.0
  %115 = vmatpush1.msra.mxu0 0.0
  %116 = vmatprep.subr.mxu0 0.0
  %117 = vmatpush1.msra.mxu0 0.0
  %118 = vmatprep.subr.mxu0 0.0
  %119 = vmatpush1.msra.mxu0 0.0
  %120 = vmatprep.subr.mxu0 0.0
  %121 = vmatpush1.msra.mxu0 0.0
  %122 = vmatprep.subr.mxu0 0.0
  %123 = vmatpush1.msra.mxu0 0.0
  %124 = vmatprep.subr.mxu0 0.0
  %125 = vmatpush1.msra.mxu0 0.0
  %126 = vmatprep.subr.mxu0 0.0
  %127 = vmatpush1.msra.mxu0 0.0
  %128 = vmatprep.mubr.f32.mxu0 0.0
  %129 = vmatmul.mubr.f32.gmra.mrb[0].mxu0 %v59
  %v130 = vpop.f32.mrb[0].mxu0
  %v131 = vadd.f32 %v55, %v130
  %v132 = vpop.f32.mrb[0].mxu0
  %133 = vmatprep.mubr.f32.mxu0 0.0
  %134 = vmatmul.mubr.f32.gmra.mrb[0].mxu0 %v62
  %v135 = vpop.f32.mrb[0].mxu0
  %v136 = vadd.f32 %v55, %v135
  %v137 = vpop.f32.mrb[0].mxu0
  %138 = vdwg.mxu0
  %v139 = vld [vmem:[%s4] sm:$0x1]
  %141 = vset.pattern.permute.xlu0 0
  %142 = vperm.xlu0 %141, %v44
  %v143 = vpop.permute.xlu0 %142
  %146 = vset.pattern.permute.xlu0 0
  %147 = vperm.xlu0 %146, %v45
  %v148 = vpop.permute.xlu0 %147
  %v150 = vlaneseq
  %v151 = vshrl.u32 %v150, 7
  %v152 = vsub.s32 0, %v151
  %v153 = vrot.slane %v139, %v152
  %v154 = vmul.f32 %v143, %v153
  %v155 = vmul.f32 %v148, %v153
  %v156 = vld [vmem:[%s4 + $0x1] sm:$0x1]
  %157 = vset.pattern.permute.xlu0 1
  %158 = vperm.xlu0 %157, %v44
  %v159 = vpop.permute.xlu0 %158
  %161 = vset.pattern.permute.xlu0 1
  %162 = vperm.xlu0 %161, %v45
  %v163 = vpop.permute.xlu0 %162
  %v165 = vlaneseq
  %v166 = vshrl.u32 %v165, 7
  %v167 = vsub.s32 0, %v166
  %v168 = vrot.slane %v156, %v167
  %v169 = vmul.f32 %v159, %v168
  %v170 = vmul.f32 %v163, %v168
  %v171 = vadd.f32 %v154, %v169
  %v172 = vadd.f32 %v155, %v170
  %v173 = vld [vmem:[%s4 + $0x2] sm:$0x1]
  %174 = vset.pattern.permute.xlu0 2
  %175 = vperm.xlu0 %174, %v44
  %v176 = vpop.permute.xlu0 %175
  %178 = vset.pattern.permute.xlu0 2
  %179 = vperm.xlu0 %178, %v45
  %v180 = vpop.permute.xlu0 %179
  %v182 = vlaneseq
  %v183 = vshrl.u32 %v182, 7
  %v184 = vsub.s32 0, %v183
  %v185 = vrot.slane %v173, %v184
  %v186 = vmul.f32 %v176, %v185
  %v187 = vmul.f32 %v180, %v185
  %v188 = vadd.f32 %v171, %v186
  %v189 = vadd.f32 %v172, %v187
  %v190 = vld [vmem:[%s4 + $0x3] sm:$0x1]
  %191 = vset.pattern.permute.xlu0 3
  %192 = vperm.xlu0 %191, %v44
  %v193 = vpop.permute.xlu0 %192
  %195 = vset.pattern.permute.xlu0 3
  %196 = vperm.xlu0 %195, %v45
  %v197 = vpop.permute.xlu0 %196
  %v199 = vlaneseq
  %v200 = vshrl.u32 %v199, 7
  %v201 = vsub.s32 0, %v200
  %v202 = vrot.slane %v190, %v201
  %v203 = vmul.f32 %v193, %v202
  %v204 = vmul.f32 %v197, %v202
  %v205 = vadd.f32 %v188, %v203
  %v206 = vadd.f32 %v189, %v204
  %v207 = vadd.f32 %v131, %v205
  %v208 = vadd.f32 %v136, %v206
  %v209 = vld [vmem:[%s5] sm:$0x1]
  %v211 = vlaneseq
  %v212 = vshrl.u32 %v211, 7
  %v213 = vsub.s32 0, %v212
  %v214 = vrot.slane %v209, %v213
  %v216 = vadd.f32 %v207, %v214
  %v217 = vadd.f32 %v208, %v214
  %v218 = vld [vmem:[%s6] sm:$0x1]
  %v220 = vlaneseq
  %v221 = vshrl.u32 %v220, 7
  %v222 = vsub.s32 0, %v221
  %v223 = vrot.slane %v218, %v222
  %v225 = vadd.f32 %v131, %v223
  %v226 = vadd.f32 %v136, %v223
  %v227 = vld [vmem:[%s7] sm:$0xff]
  %v228 = vld [vmem:[%s7 + $0x8] sm:$0xff]
  %v229 = vld [vmem:[%s7 + $0x10] sm:$0xff]
  %v230 = vld [vmem:[%s7 + $0x18] sm:$0xff]
  %v231 = vld [vmem:[%s7 + $0x20] sm:$0xff]
  %v232 = vld [vmem:[%s7 + $0x28] sm:$0xff]
  %v233 = vld [vmem:[%s7 + $0x30] sm:$0xff]
  %v234 = vld [vmem:[%s7 + $0x38] sm:$0xff]
  %v235 = vld [vmem:[%s7 + $0x40] sm:$0xff]
  %v236 = vld [vmem:[%s7 + $0x48] sm:$0xff]
  %v237 = vld [vmem:[%s7 + $0x50] sm:$0xff]
  %v238 = vld [vmem:[%s7 + $0x58] sm:$0xff]
  %v239 = vld [vmem:[%s7 + $0x60] sm:$0xff]
  %v240 = vld [vmem:[%s7 + $0x68] sm:$0xff]
  %v241 = vld [vmem:[%s7 + $0x70] sm:$0xff]
  %v242 = vld [vmem:[%s7 + $0x78] sm:$0xff]
  %v243 = vld [vmem:[%s8] sm:$0x1]
  %v245 = vlaneseq
  %v246 = vshrl.u32 %v245, 7
  %v247 = vsub.s32 0, %v246
  %v248 = vrot.slane %v243, %v247
  %250 = vmatprep.subr.mxu0 0.0
  %251 = vmatpush1.msra.mxu0 %v227
  %252 = vmatprep.subr.mxu0 0.0
  %253 = vmatpush1.msra.mxu0 %v228
  %254 = vmatprep.subr.mxu0 0.0
  %255 = vmatpush1.msra.mxu0 %v229
  %256 = vmatprep.subr.mxu0 0.0
  %257 = vmatpush1.msra.mxu0 %v230
  %258 = vmatprep.subr.mxu0 0.0
  %259 = vmatpush1.msra.mxu0 %v231
  %260 = vmatprep.subr.mxu0 0.0
  %261 = vmatpush1.msra.mxu0 %v232
  %262 = vmatprep.subr.mxu0 0.0
  %263 = vmatpush1.msra.mxu0 %v233
  %264 = vmatprep.subr.mxu0 0.0
  %265 = vmatpush1.msra.mxu0 %v234
  %266 = vmatprep.subr.mxu0 0.0
  %267 = vmatpush1.msra.mxu0 %v235
  %268 = vmatprep.subr.mxu0 0.0
  %269 = vmatpush1.msra.mxu0 %v236
  %270 = vmatprep.subr.mxu0 0.0
  %271 = vmatpush1.msra.mxu0 %v237
  %272 = vmatprep.subr.mxu0 0.0
  %273 = vmatpush1.msra.mxu0 %v238
  %274 = vmatprep.subr.mxu0 0.0
  %275 = vmatpush1.msra.mxu0 %v239
  %276 = vmatprep.subr.mxu0 0.0
  %277 = vmatpush1.msra.mxu0 %v240
  %278 = vmatprep.subr.mxu0 0.0
  %279 = vmatpush1.msra.mxu0 %v241
  %280 = vmatprep.subr.mxu0 0.0
  %281 = vmatpush1.msra.mxu0 %v242
  %282 = vmatprep.subr.mxu0 0.0
  %283 = vmatpush1.msra.mxu0 0.0
  %284 = vmatprep.subr.mxu0 0.0
  %285 = vmatpush1.msra.mxu0 0.0
  %286 = vmatprep.subr.mxu0 0.0
  %287 = vmatpush1.msra.mxu0 0.0
  %288 = vmatprep.subr.mxu0 0.0
  %289 = vmatpush1.msra.mxu0 0.0
  %290 = vmatprep.subr.mxu0 0.0
  %291 = vmatpush1.msra.mxu0 0.0
  %292 = vmatprep.subr.mxu0 0.0
  %293 = vmatpush1.msra.mxu0 0.0
  %294 = vmatprep.subr.mxu0 0.0
  %295 = vmatpush1.msra.mxu0 0.0
  %296 = vmatprep.subr.mxu0 0.0
  %297 = vmatpush1.msra.mxu0 0.0
  %298 = vmatprep.subr.mxu0 0.0
  %299 = vmatpush1.msra.mxu0 0.0
  %300 = vmatprep.subr.mxu0 0.0
  %301 = vmatpush1.msra.mxu0 0.0
  %302 = vmatprep.subr.mxu0 0.0
  %303 = vmatpush1.msra.mxu0 0.0
  %304 = vmatprep.subr.mxu0 0.0
  %305 = vmatpush1.msra.mxu0 0.0
  %306 = vmatprep.subr.mxu0 0.0
  %307 = vmatpush1.msra.mxu0 0.0
  %308 = vmatprep.subr.mxu0 0.0
  %309 = vmatpush1.msra.mxu0 0.0
  %310 = vmatprep.subr.mxu0 0.0
  %311 = vmatpush1.msra.mxu0 0.0
  %312 = vmatprep.subr.mxu0 0.0
  %313 = vmatpush1.msra.mxu0 0.0
  %314 = vmatprep.mubr.f32.mxu0 0.0
  %315 = vmatmul.mubr.f32.gmra.mrb[0].mxu0 %v216
  %v316 = vpop.f32.mrb[0].mxu0
  %v317 = vadd.f32 %v248, %v316
  %v318 = vpop.f32.mrb[0].mxu0
  %319 = vmatprep.mubr.f32.mxu0 0.0
  %320 = vmatmul.mubr.f32.gmra.mrb[0].mxu0 %v217
  %v321 = vpop.f32.mrb[0].mxu0
  %v322 = vadd.f32 %v248, %v321
  %v323 = vpop.f32.mrb[0].mxu0
  %324 = vmatprep.mubr.f32.mxu0 0.0
  %325 = vmatmul.mubr.f32.gmra.mrb[0].mxu0 %v225
  %v326 = vpop.f32.mrb[0].mxu0
  %v327 = vadd.f32 %v248, %v326
  %v328 = vpop.f32.mrb[0].mxu0
  %329 = vmatprep.mubr.f32.mxu0 0.0
  %330 = vmatmul.mubr.f32.gmra.mrb[0].mxu0 %v226
  %v331 = vpop.f32.mrb[0].mxu0
  %v332 = vadd.f32 %v248, %v331
  %v333 = vpop.f32.mrb[0].mxu0
  %334 = vdwg.mxu0
  %v335 = vmul.f32 %v216, 0.5
  %v336 = vmul.f32 %v217, 0.5
  %v337 = vmul.f32 %v225, 0.5
  %v338 = vmul.f32 %v226, 0.5
  %v339 = vtanh.pop %v317
  %v340 = vtanh.pop %v322
  %v341 = vtanh.pop %v327
  %v342 = vtanh.pop %v332
  %v343 = vmul.f32 %v339, 0.5
  %v344 = vmul.f32 %v340, 0.5
  %v345 = vmul.f32 %v341, 0.5
  %v346 = vmul.f32 %v342, 0.5
  %v347 = vadd.f32 %v335, %v343
  %v348 = vadd.f32 %v336, %v344
  %v349 = vadd.f32 %v337, %v345
  %v350 = vadd.f32 %v338, %v346
  %s351 = scalar_lea.vmem %s7, 128
  %v352 = vld [vmem:[%s351] sm:$0xff]
  %v353 = vld [vmem:[%s351 + $0x8] sm:$0xff]
  %v354 = vld [vmem:[%s351 + $0x10] sm:$0xff]
  %v355 = vld [vmem:[%s351 + $0x18] sm:$0xff]
  %v356 = vld [vmem:[%s351 + $0x20] sm:$0xff]
  %v357 = vld [vmem:[%s351 + $0x28] sm:$0xff]
  %v358 = vld [vmem:[%s351 + $0x30] sm:$0xff]
  %v359 = vld [vmem:[%s351 + $0x38] sm:$0xff]
  %v360 = vld [vmem:[%s351 + $0x40] sm:$0xff]
  %v361 = vld [vmem:[%s351 + $0x48] sm:$0xff]
  %v362 = vld [vmem:[%s351 + $0x50] sm:$0xff]
  %v363 = vld [vmem:[%s351 + $0x58] sm:$0xff]
  %v364 = vld [vmem:[%s351 + $0x60] sm:$0xff]
  %v365 = vld [vmem:[%s351 + $0x68] sm:$0xff]
  %v366 = vld [vmem:[%s351 + $0x70] sm:$0xff]
  %v367 = vld [vmem:[%s351 + $0x78] sm:$0xff]
  %s368 = scalar_lea.vmem %s8, 1
  %v369 = vld [vmem:[%s368] sm:$0x1]
  %v371 = vlaneseq
  %v372 = vshrl.u32 %v371, 7
  %v373 = vsub.s32 0, %v372
  %v374 = vrot.slane %v369, %v373
  %376 = vmatprep.subr.mxu0 0.0
  %377 = vmatpush1.msra.mxu0 %v352
  %378 = vmatprep.subr.mxu0 0.0
  %379 = vmatpush1.msra.mxu0 %v353
  %380 = vmatprep.subr.mxu0 0.0
  %381 = vmatpush1.msra.mxu0 %v354
  %382 = vmatprep.subr.mxu0 0.0
  %383 = vmatpush1.msra.mxu0 %v355
  %384 = vmatprep.subr.mxu0 0.0
  %385 = vmatpush1.msra.mxu0 %v356
  %386 = vmatprep.subr.mxu0 0.0
  %387 = vmatpush1.msra.mxu0 %v357
  %388 = vmatprep.subr.mxu0 0.0
  %389 = vmatpush1.msra.mxu0 %v358
  %390 = vmatprep.subr.mxu0 0.0
  %391 = vmatpush1.msra.mxu0 %v359
  %392 = vmatprep.subr.mxu0 0.0
  %393 = vmatpush1.msra.mxu0 %v360
  %394 = vmatprep.subr.mxu0 0.0
  %395 = vmatpush1.msra.mxu0 %v361
  %396 = vmatprep.subr.mxu0 0.0
  %397 = vmatpush1.msra.mxu0 %v362
  %398 = vmatprep.subr.mxu0 0.0
  %399 = vmatpush1.msra.mxu0 %v363
  %400 = vmatprep.subr.mxu0 0.0
  %401 = vmatpush1.msra.mxu0 %v364
  %402 = vmatprep.subr.mxu0 0.0
  %403 = vmatpush1.msra.mxu0 %v365
  %404 = vmatprep.subr.mxu0 0.0
  %405 = vmatpush1.msra.mxu0 %v366
  %406 = vmatprep.subr.mxu0 0.0
  %407 = vmatpush1.msra.mxu0 %v367
  %408 = vmatprep.subr.mxu0 0.0
  %409 = vmatpush1.msra.mxu0 0.0
  %410 = vmatprep.subr.mxu0 0.0
  %411 = vmatpush1.msra.mxu0 0.0
  %412 = vmatprep.subr.mxu0 0.0
  %413 = vmatpush1.msra.mxu0 0.0
  %414 = vmatprep.subr.mxu0 0.0
  %415 = vmatpush1.msra.mxu0 0.0
  %416 = vmatprep.subr.mxu0 0.0
  %417 = vmatpush1.msra.mxu0 0.0
  %418 = vmatprep.subr.mxu0 0.0
  %419 = vmatpush1.msra.mxu0 0.0
  %420 = vmatprep.subr.mxu0 0.0
  %421 = vmatpush1.msra.mxu0 0.0
  %422 = vmatprep.subr.mxu0 0.0
  %423 = vmatpush1.msra.mxu0 0.0
  %424 = vmatprep.subr.mxu0 0.0
  %425 = vmatpush1.msra.mxu0 0.0
  %426 = vmatprep.subr.mxu0 0.0
  %427 = vmatpush1.msra.mxu0 0.0
  %428 = vmatprep.subr.mxu0 0.0
  %429 = vmatpush1.msra.mxu0 0.0
  %430 = vmatprep.subr.mxu0 0.0
  %431 = vmatpush1.msra.mxu0 0.0
  %432 = vmatprep.subr.mxu0 0.0
  %433 = vmatpush1.msra.mxu0 0.0
  %434 = vmatprep.subr.mxu0 0.0
  %435 = vmatpush1.msra.mxu0 0.0
  %436 = vmatprep.subr.mxu0 0.0
  %437 = vmatpush1.msra.mxu0 0.0
  %438 = vmatprep.subr.mxu0 0.0
  %439 = vmatpush1.msra.mxu0 0.0
  %440 = vmatprep.mubr.f32.mxu0 0.0
  %441 = vmatmul.mubr.f32.gmra.mrb[0].mxu0 %v347
  %v442 = vpop.f32.mrb[0].mxu0
  %v443 = vadd.f32 %v374, %v442
  %v444 = vpop.f32.mrb[0].mxu0
  %445 = vmatprep.mubr.f32.mxu0 0.0
  %446 = vmatmul.mubr.f32.gmra.mrb[0].mxu0 %v348
  %v447 = vpop.f32.mrb[0].mxu0
  %v448 = vadd.f32 %v374, %v447
  %v449 = vpop.f32.mrb[0].mxu0
  %450 = vmatprep.mubr.f32.mxu0 0.0
  %451 = vmatmul.mubr.f32.gmra.mrb[0].mxu0 %v349
  %v452 = vpop.f32.mrb[0].mxu0
  %v453 = vadd.f32 %v374, %v452
  %v454 = vpop.f32.mrb[0].mxu0
  %455 = vmatprep.mubr.f32.mxu0 0.0
  %456 = vmatmul.mubr.f32.gmra.mrb[0].mxu0 %v350
  %v457 = vpop.f32.mrb[0].mxu0
  %v458 = vadd.f32 %v374, %v457
  %v459 = vpop.f32.mrb[0].mxu0
  %460 = vdwg.mxu0
  %v461 = vmul.f32 %v347, 0.5
  %v462 = vmul.f32 %v348, 0.5
  %v463 = vmul.f32 %v349, 0.5
  %v464 = vmul.f32 %v350, 0.5
  %v465 = vtanh.pop %v443
  %v466 = vtanh.pop %v448
  %v467 = vtanh.pop %v453
  %v468 = vtanh.pop %v458
  %v469 = vmul.f32 %v465, 0.5
  %v470 = vmul.f32 %v466, 0.5
  %v471 = vmul.f32 %v467, 0.5
  %v472 = vmul.f32 %v468, 0.5
  %v473 = vadd.f32 %v461, %v469
  %v474 = vadd.f32 %v462, %v470
  %v475 = vadd.f32 %v463, %v471
  %v476 = vadd.f32 %v464, %v472
  %v477 = vld [vmem:[%s9] sm:$0xff]
  %v478 = vld [vmem:[%s9 + $0x8] sm:$0xff]
  %v479 = vld [vmem:[%s9 + $0x10] sm:$0xff]
  %v480 = vld [vmem:[%s9 + $0x18] sm:$0xff]
  %v481 = vld [vmem:[%s9 + $0x20] sm:$0xff]
  %v482 = vld [vmem:[%s9 + $0x28] sm:$0xff]
  %v483 = vld [vmem:[%s9 + $0x30] sm:$0xff]
  %v484 = vld [vmem:[%s9 + $0x38] sm:$0xff]
  %v485 = vld [vmem:[%s9 + $0x40] sm:$0xff]
  %v486 = vld [vmem:[%s9 + $0x48] sm:$0xff]
  %v487 = vld [vmem:[%s9 + $0x50] sm:$0xff]
  %v488 = vld [vmem:[%s9 + $0x58] sm:$0xff]
  %v489 = vld [vmem:[%s9 + $0x60] sm:$0xff]
  %v490 = vld [vmem:[%s9 + $0x68] sm:$0xff]
  %v491 = vld [vmem:[%s9 + $0x70] sm:$0xff]
  %v492 = vld [vmem:[%s9 + $0x78] sm:$0xff]
  %v493 = vld [vmem:[%s10] sm:$0x1]
  %v495 = vlaneseq
  %v496 = vshrl.u32 %v495, 7
  %v497 = vsub.s32 0, %v496
  %v498 = vrot.slane %v493, %v497
  %500 = vmatprep.subr.mxu0 0.0
  %501 = vmatpush1.msra.mxu0 %v477
  %502 = vmatprep.subr.mxu0 0.0
  %503 = vmatpush1.msra.mxu0 %v478
  %504 = vmatprep.subr.mxu0 0.0
  %505 = vmatpush1.msra.mxu0 %v479
  %506 = vmatprep.subr.mxu0 0.0
  %507 = vmatpush1.msra.mxu0 %v480
  %508 = vmatprep.subr.mxu0 0.0
  %509 = vmatpush1.msra.mxu0 %v481
  %510 = vmatprep.subr.mxu0 0.0
  %511 = vmatpush1.msra.mxu0 %v482
  %512 = vmatprep.subr.mxu0 0.0
  %513 = vmatpush1.msra.mxu0 %v483
  %514 = vmatprep.subr.mxu0 0.0
  %515 = vmatpush1.msra.mxu0 %v484
  %516 = vmatprep.subr.mxu0 0.0
  %517 = vmatpush1.msra.mxu0 %v485
  %518 = vmatprep.subr.mxu0 0.0
  %519 = vmatpush1.msra.mxu0 %v486
  %520 = vmatprep.subr.mxu0 0.0
  %521 = vmatpush1.msra.mxu0 %v487
  %522 = vmatprep.subr.mxu0 0.0
  %523 = vmatpush1.msra.mxu0 %v488
  %524 = vmatprep.subr.mxu0 0.0
  %525 = vmatpush1.msra.mxu0 %v489
  %526 = vmatprep.subr.mxu0 0.0
  %527 = vmatpush1.msra.mxu0 %v490
  %528 = vmatprep.subr.mxu0 0.0
  %529 = vmatpush1.msra.mxu0 %v491
  %530 = vmatprep.subr.mxu0 0.0
  %531 = vmatpush1.msra.mxu0 %v492
  %532 = vmatprep.subr.mxu0 0.0
  %533 = vmatpush1.msra.mxu0 0.0
  %534 = vmatprep.subr.mxu0 0.0
  %535 = vmatpush1.msra.mxu0 0.0
  %536 = vmatprep.subr.mxu0 0.0
  %537 = vmatpush1.msra.mxu0 0.0
  %538 = vmatprep.subr.mxu0 0.0
  %539 = vmatpush1.msra.mxu0 0.0
  %540 = vmatprep.subr.mxu0 0.0
  %541 = vmatpush1.msra.mxu0 0.0
  %542 = vmatprep.subr.mxu0 0.0
  %543 = vmatpush1.msra.mxu0 0.0
  %544 = vmatprep.subr.mxu0 0.0
  %545 = vmatpush1.msra.mxu0 0.0
  %546 = vmatprep.subr.mxu0 0.0
  %547 = vmatpush1.msra.mxu0 0.0
  %548 = vmatprep.subr.mxu0 0.0
  %549 = vmatpush1.msra.mxu0 0.0
  %550 = vmatprep.subr.mxu0 0.0
  %551 = vmatpush1.msra.mxu0 0.0
  %552 = vmatprep.subr.mxu0 0.0
  %553 = vmatpush1.msra.mxu0 0.0
  %554 = vmatprep.subr.mxu0 0.0
  %555 = vmatpush1.msra.mxu0 0.0
  %556 = vmatprep.subr.mxu0 0.0
  %557 = vmatpush1.msra.mxu0 0.0
  %558 = vmatprep.subr.mxu0 0.0
  %559 = vmatpush1.msra.mxu0 0.0
  %560 = vmatprep.subr.mxu0 0.0
  %561 = vmatpush1.msra.mxu0 0.0
  %562 = vmatprep.subr.mxu0 0.0
  %563 = vmatpush1.msra.mxu0 0.0
  %564 = vmatprep.mubr.f32.mxu0 0.0
  %565 = vmatmul.mubr.f32.gmra.mrb[0].mxu0 %v473
  %v566 = vpop.f32.mrb[0].mxu0
  %v567 = vadd.f32 %v498, %v566
  %v568 = vpop.f32.mrb[0].mxu0
  %569 = vmatprep.mubr.f32.mxu0 0.0
  %570 = vmatmul.mubr.f32.gmra.mrb[0].mxu0 %v474
  %v571 = vpop.f32.mrb[0].mxu0
  %v572 = vadd.f32 %v498, %v571
  %v573 = vpop.f32.mrb[0].mxu0
  %574 = vmatprep.mubr.f32.mxu0 0.0
  %575 = vmatmul.mubr.f32.gmra.mrb[0].mxu0 %v475
  %v576 = vpop.f32.mrb[0].mxu0
  %v577 = vadd.f32 %v498, %v576
  %v578 = vpop.f32.mrb[0].mxu0
  %579 = vmatprep.mubr.f32.mxu0 0.0
  %580 = vmatmul.mubr.f32.gmra.mrb[0].mxu0 %v476
  %v581 = vpop.f32.mrb[0].mxu0
  %v582 = vadd.f32 %v498, %v581
  %v583 = vpop.f32.mrb[0].mxu0
  %584 = vdwg.mxu0
  %v585 = vsub.f32 0.0, %v567
  %v586 = vsub.f32 0.0, %v572
  %v587 = vsub.f32 0.0, %v577
  %v588 = vsub.f32 0.0, %v582
  %v589 = vxor.u32 %v585, 2147483648
  %v590 = vxor.u32 %v586, 2147483648
  %v591 = vxor.u32 %v587, 2147483648
  %v592 = vxor.u32 %v588, 2147483648
  %v593 = vmul.f32 %v589, 1.442695
  %v594 = vpow.pop %v593
  %v595 = vmul.f32 %v590, 1.442695
  %v596 = vpow.pop %v595
  %v597 = vmul.f32 %v591, 1.442695
  %v598 = vpow.pop %v597
  %v599 = vmul.f32 %v592, 1.442695
  %v600 = vpow.pop %v599
  %v601 = vadd.f32 %v594, 1.0
  %v602 = vadd.f32 %v596, 1.0
  %v603 = vadd.f32 %v598, 1.0
  %v604 = vadd.f32 %v600, 1.0
  %v605 = vrcp.pop %v601
  %v606 = vmul.f32 1.0, %v605
  %v607 = vrcp.pop %v602
  %v608 = vmul.f32 1.0, %v607
  %v609 = vrcp.pop %v603
  %v610 = vmul.f32 1.0, %v609
  %v611 = vrcp.pop %v604
  %v612 = vmul.f32 1.0, %v611
  %vm613 = vcmask 31744
  %v614 = vsel %vm613, %v610, 0.0
  %615 = vadd.xlane.f32.xlu0 %v614
  %v616 = vpop.xlane.xlu0 %615
  %v617 = vsel %vm613, %v612, 0.0
  %618 = vadd.xlane.f32.xlu0 %v617
  %v619 = vpop.xlane.xlu0 %618
  %v620 = vadd.f32 %v616, 1e-08
  %v621 = vadd.f32 %v619, 1e-08
  %v622 = vrcp.pop %v620
  %v623 = vmul.f32 %v606, %v622
  %v624 = vrcp.pop %v621
  %v625 = vmul.f32 %v608, %v624
  %626 = vst.msk [vmem:[%s11] sm:$0xff] %vm613, %v623
  %627 = vst.msk [vmem:[%s11 + $0x8] sm:$0xff] %vm613, %v625
  // Predicated region
  $region46: #{ifib_forward.1} parent=0 // pred_check
    _
  $region47: #{ifib_forward.1} parent=0 // pred_check_branch
    %629 = sbr.rel (0) target = $region49
  $region48: #{ifib_forward.1} parent=0 // pred_region
    _
  $region49: #{ifib_forward.1} parent=0 // pred_fallthru
    _
  // Predicated region
  $region50: #{ifib_forward.1} parent=0 // pred_check
    _
  $region51: #{ifib_forward.1} parent=0 // pred_check_branch
    %631 = sbr.rel (0) target = $region53
  $region52: #{ifib_forward.1} parent=0 // pred_region
    _
  $region53: #{ifib_forward.1} parent=0 // pred_fallthru
    _

</llo_original>
